<compile_context>
chip_gen: v7x
topology: tpu7x:2x2x1
jax: 0.10.0
libtpu: 0.0.40
codegen_flags: <defaults>
</compile_context>

<pallas_src>
import functools

import jax
import jax.numpy as jnp
from jax import lax
from jax.experimental import pallas as pl
from jax.experimental.pallas import tpu as pltpu

_LANE = 128
_SUBLANE = 8
_EPS = 1e-12                 # torch.nn.functional.normalize default eps
_ORDER_CHUNK = 8             # s rows handled per chunk in the order measure


def _round_up(x, m):
    return (x + m - 1) // m * m


def _vmem_budget_bytes():
    """~3/4 of the chip's physical VMEM (64 MiB on v7x, 128 MiB on v5e/v6e)."""
    cap = 64 * 1024 * 1024
    try:
        cap = int(getattr(pltpu.get_tpu_info(), "vmem_capacity_bytes", cap))
    except Exception:
        pass
    return (cap * 3) // 4


# ---------------------------------------------------------------------------
# Pass 1: inverse norms + matched-pair diagonal (row-tile grid).
# ---------------------------------------------------------------------------
def _stats_kernel(im_ref, s_ref, inv_im_ref, inv_s_ref, diag_ref, *, measure):
    im = im_ref[...].astype(jnp.float32)
    s = s_ref[...].astype(jnp.float32)
    # x / max(||x||, eps) == x * rsqrt(max(||x||^2, eps^2)); rsqrt runs on the EUP.
    inv_im = lax.rsqrt(jnp.maximum(jnp.sum(im * im, axis=1, keepdims=True), _EPS * _EPS))
    inv_s = lax.rsqrt(jnp.maximum(jnp.sum(s * s, axis=1, keepdims=True), _EPS * _EPS))
    inv_im_ref[...] = inv_im
    inv_s_ref[...] = inv_s
    if measure == "order":
        diff = jnp.maximum(s * inv_s - im * inv_im, 0.0)
        diag_ref[...] = -jnp.sqrt(jnp.sum(diff * diff, axis=1, keepdims=True))
    else:
        diag_ref[...] = jnp.sum(im * s, axis=1, keepdims=True) * inv_im * inv_s


# ---------------------------------------------------------------------------
# Pass 2: blockwise scores + margin costs + flash-style partial reductions.
# ---------------------------------------------------------------------------
def _loss_kernel(im_ref, s_ref, inv_im_ref, inv_sc_ref, inv_sr_ref, dcol_ref, drow_ref,
                 out1_ref, out2_ref, acc_ref, sc_ref, *,
                 margin, measure, max_violation, batch, tile, d_pad,
                 mask_pad, s_resident):
    i = pl.program_id(0)
    j = pl.program_id(1)

    @pl.when(j == 0)
    def _init():
        acc_ref[...] = jnp.zeros_like(acc_ref)

    if measure == "order":
        # scores[r, c] = -|| relu(s_c - im_r) ||_2.  Chunk the feature axis into
        # 128-lane slabs and the s rows into 8-row chunks; accumulate squared
        # sums straight into the (tile, tile) VMEM scores scratch.
        inv_im = inv_im_ref[...]                                    # (tile, 1)
        nd = d_pad // _LANE
        nc = tile // _ORDER_CHUNK
        for cj in range(nc):
            c0 = cj * _ORDER_CHUNK
            inv_s = inv_sc_ref[c0:c0 + _ORDER_CHUNK, :]             # (8, 1)
            sq = jnp.zeros((tile, _ORDER_CHUNK), jnp.float32)
            for dk in range(nd):
                d0 = dk * _LANE
                im_slab = im_ref[:, d0:d0 + _LANE].astype(jnp.float32) * inv_im
                if s_resident:
                    r0 = pl.multiple_of(j * tile + c0, _ORDER_CHUNK)
                    s_rows = s_ref[pl.ds(r0, _ORDER_CHUNK), d0:d0 + _LANE]
                else:
                    s_rows = s_ref[c0:c0 + _ORDER_CHUNK, d0:d0 + _LANE]
                s_slab = s_rows.astype(jnp.float32) * inv_s          # (8, 128)
                diff = jnp.maximum(s_slab[None, :, :] - im_slab[:, None, :], 0.0)
                sq = sq + jnp.sum(diff * diff, axis=2)
            sc_ref[:, c0:c0 + _ORDER_CHUNK] = -jnp.sqrt(sq)
        scores = sc_ref[...]
    else:
        # cosine: raw tile matmul on the MXU (bf16 operands, f32 accumulation);
        # normalization folded in post-hoc via implicit broadcasts.
        if s_resident:
            r0 = pl.multiple_of(j * tile, _SUBLANE)
            s_tile = s_ref[pl.ds(r0, tile), :]
        else:
            s_tile = s_ref[...]
        raw = lax.dot_general(im_ref[...], s_tile,
                              dimension_numbers=(((1,), (1,)), ((), ())),
                              preferred_element_type=jnp.float32)
        scores = raw * inv_im_ref[...] * inv_sr_ref[...]

    # Diagonal entries only occur in i == j blocks (tile_m == tile_n); padded
    # rows/cols are masked only when the batch was actually padded.
    loc = (lax.broadcasted_iota(jnp.int32, (tile, tile), 0)
           - lax.broadcasted_iota(jnp.int32, (tile, tile), 1))
    kill = jnp.logical_and(loc == 0, i == j)
    if mask_pad:
        row_bad = (i * tile + lax.broadcasted_iota(jnp.int32, (tile, 1), 0)) >= batch
        col_bad = (j * tile + lax.broadcasted_iota(jnp.int32, (1, tile), 1)) >= batch
        kill = jnp.logical_or(kill, jnp.logical_or(row_bad, col_bad))

    # cost_s first; fold it into the accumulator before cost_im is materialized
    # to keep the per-step temporary footprint low.
    cost_s = jnp.where(kill, 0.0, jnp.maximum(margin + scores - dcol_ref[...], 0.0))
    if max_violation:
        acc_ref[...] = jnp.maximum(acc_ref[...], jnp.max(cost_s, axis=1, keepdims=True))
    else:
        acc_ref[...] = acc_ref[...] + jnp.sum(cost_s, axis=1, keepdims=True)

    cost_im = jnp.where(kill, 0.0, jnp.maximum(margin + scores - drow_ref[...], 0.0))
    if max_violation:
        red_im = jnp.max(cost_im, axis=0, keepdims=True)
    else:
        red_im = jnp.sum(cost_im, axis=0, keepdims=True)
    out2_ref[...] = red_im.reshape(1, 1, tile)

    @pl.when(j == pl.num_programs(1) - 1)
    def _finalize():
        out1_ref[...] = jnp.sum(acc_ref[...]).reshape(1, 1, 1)


def contrastive_loss(im, s, *, margin, measure="cosine", max_violation=False,
                     use_bf16=True):
    """JAX/Pallas equivalent of ContrastiveLoss(margin, measure, max_violation)(im, s)."""
    assert im.ndim == 2 and s.ndim == 2 and im.shape == s.shape
    batch, dim = im.shape
    cdt = jnp.promote_types(im.dtype, s.dtype)
    im = im.astype(cdt)
    s = s.astype(cdt)

    budget = _vmem_budget_bytes()

    # ---- tiling ------------------------------------------------------------
    base_tile = 128 if measure == "order" else 256
    tile = _round_up(batch, _SUBLANE) if batch <= base_tile else base_tile
    b_pad = _round_up(batch, tile)
    d_pad = _round_up(dim, _LANE)
    num_tiles = b_pad // tile
    mask_pad = b_pad != batch

    if (b_pad, d_pad) != (batch, dim):
        im = jnp.pad(im, ((0, b_pad - batch), (0, d_pad - dim)))
        s = jnp.pad(s, ((0, b_pad - batch), (0, d_pad - dim)))

    # Pass-2 operand dtype: bf16 for the cosine MXU path (f32 accumulation).
    if measure != "order" and use_bf16 and jnp.dtype(cdt) == jnp.dtype(jnp.float32):
        op_dtype = jnp.bfloat16
    else:
        op_dtype = cdt
    op_bytes = jnp.dtype(op_dtype).itemsize

    # Keep s fully VMEM-resident in pass 2 whenever it fits the budget.
    resident_bytes = 2 * b_pad * d_pad * op_bytes      # constant-index block, 2 pipeline bufs
    stream_bytes = 2 * tile * d_pad * op_bytes         # im row tile, double buffered
    s_resident = num_tiles > 1 and (resident_bytes + stream_bytes + (8 << 20)) <= budget

    # ---- Pass 1: inverse norms + matched-pair diagonal ----------------------
    p1_tile = tile
    for cand in (1024, 512):
        if cand > p1_tile and b_pad % cand == 0 and 10 * cand * d_pad * 4 <= budget:
            p1_tile = cand
            break

    inv_im, inv_s, diag = pl.pallas_call(
        functools.partial(_stats_kernel, measure=measure),
        out_shape=(
            jax.ShapeDtypeStruct((b_pad, 1), jnp.float32),
            jax.ShapeDtypeStruct((b_pad, 1), jnp.float32),
            jax.ShapeDtypeStruct((b_pad, 1), jnp.float32),
        ),
        grid_spec=pltpu.PrefetchScalarGridSpec(
            num_scalar_prefetch=0,
            grid=(b_pad // p1_tile,),
            in_specs=[
                pl.BlockSpec((p1_tile, d_pad), lambda i: (i, 0)),
                pl.BlockSpec((p1_tile, d_pad), lambda i: (i, 0)),
            ],
            out_specs=(
                pl.BlockSpec((p1_tile, 1), lambda i: (i, 0)),
                pl.BlockSpec((p1_tile, 1), lambda i: (i, 0)),
                pl.BlockSpec((p1_tile, 1), lambda i: (i, 0)),
            ),
        ),
        compiler_params=pltpu.CompilerParams(
            dimension_semantics=("parallel",),
            vmem_limit_bytes=budget,
        ),
    )(im, s)

    # Lane-oriented copies of the column-broadcast vectors (layout plumbing
    # kept outside the kernel).
    inv_s_row = jnp.reshape(inv_s, (1, b_pad))
    drow = jnp.reshape(diag, (1, b_pad))

    im_op = im.astype(op_dtype)
    s_op = s.astype(op_dtype)

    if s_resident:
        s_spec = pl.BlockSpec((b_pad, d_pad), lambda i, j: (0, 0))   # resident in VMEM
    else:
        s_spec = pl.BlockSpec((tile, d_pad), lambda i, j: (j, 0))    # streamed col tiles

    # ---- Pass 2: blockwise costs + per-row-tile partial reductions ----------
    out1, out2 = pl.pallas_call(
        functools.partial(
            _loss_kernel,
            margin=float(margin),
            measure=measure,
            max_violation=bool(max_violation),
            batch=batch,
            tile=tile,
            d_pad=d_pad,
            mask_pad=mask_pad,
            s_resident=s_resident,
        ),
        out_shape=(
            jax.ShapeDtypeStruct((num_tiles, 1, 1), jnp.float32),      # cost_s partials
            jax.ShapeDtypeStruct((num_tiles, 1, b_pad), jnp.float32),  # cost_im partials
        ),
        grid_spec=pltpu.PrefetchScalarGridSpec(
            num_scalar_prefetch=0,
            grid=(num_tiles, num_tiles),
            in_specs=[
                pl.BlockSpec((tile, d_pad), lambda i, j: (i, 0)),   # im row tile
                s_spec,                                             # s (resident or col tile)
                pl.BlockSpec((tile, 1), lambda i, j: (i, 0)),       # 1/||im_i||
                pl.BlockSpec((tile, 1), lambda i, j: (j, 0)),       # 1/||s_j|| (col-oriented)
                pl.BlockSpec((1, tile), lambda i, j: (0, j)),       # 1/||s_j|| (lane-oriented)
                pl.BlockSpec((tile, 1), lambda i, j: (i, 0)),       # diag[i]
                pl.BlockSpec((1, tile), lambda i, j: (0, j)),       # diag[j]
            ],
            out_specs=(
                pl.BlockSpec((1, 1, 1), lambda i, j: (i, 0, 0)),
                pl.BlockSpec((1, 1, tile), lambda i, j: (i, 0, j)),
            ),
            scratch_shapes=[
                pltpu.VMEM((tile, 1), jnp.float32),      # running row reduction
                pltpu.VMEM((tile, tile), jnp.float32),   # scores scratch (order path)
            ],
        ),
        compiler_params=pltpu.CompilerParams(
            dimension_semantics=("parallel", "arbitrary"),
            vmem_limit_bytes=budget,
        ),
    )(im_op, s_op, inv_im, inv_s, inv_s_row, diag, drow)

    cost_s_part = out1[:, 0, 0]      # (num_tiles,)
    cost_im_part = out2[:, 0, :]     # (num_tiles, b_pad)
    if max_violation:
        loss = jnp.sum(cost_s_part) + jnp.sum(jnp.max(cost_im_part, axis=0))
    else:
        loss = jnp.sum(cost_s_part) + jnp.sum(cost_im_part)
    return loss.astype(jnp.float32)


# ---------------------------------------------------------------------------
# Pure-JAX reference (mirrors the PyTorch module) for a correctness check.
# ---------------------------------------------------------------------------
def _reference(im, s, margin, measure, max_violation):
    im = im.astype(jnp.float32)
    s = s.astype(jnp.float32)
    im = im / jnp.maximum(jnp.linalg.norm(im, axis=1, keepdims=True), _EPS)
    s = s / jnp.maximum(jnp.linalg.norm(s, axis=1, keepdims=True), _EPS)
    if measure == "order":
        diff = jnp.maximum(s[None, :, :] - im[:, None, :], 0.0)
        scores = -jnp.sqrt(jnp.sum(diff * diff, axis=2))
    else:
        scores = im @ s.T
    diag = jnp.diagonal(scores).reshape(-1, 1)
    cost_s = jnp.maximum(margin + scores - diag, 0.0)
    cost_im = jnp.maximum(margin + scores - diag.T, 0.0)
    eye = jnp.eye(scores.shape[0], dtype=bool)
    cost_s = jnp.where(eye, 0.0, cost_s)
    cost_im = jnp.where(eye, 0.0, cost_im)
    if max_violation:
        cost_s = jnp.max(cost_s, axis=1)
        cost_im = jnp.max(cost_im, axis=0)
    return jnp.sum(cost_s) + jnp.sum(cost_im)


if __name__ == "__main__":
    key = jax.random.PRNGKey(0)
    configs = [
        dict(margin=0.2, measure="cosine", max_violation=False),
        dict(margin=0.2, measure="cosine", max_violation=True),
        dict(margin=0.2, measure="order", max_violation=False),
        dict(margin=0.2, measure="order", max_violation=True),
    ]
    # First case: the small canonical shape.  Second case exercises multi-tile
    # grids, batch/feature padding masks and the VMEM-resident s path.
    cases = [(8, 32, configs), (300, 200, [configs[0], configs[3]])]
    for batch, dim, cfgs in cases:
        key, k_im, k_s = jax.random.split(key, 3)
        im = jax.random.normal(k_im, (batch, dim), dtype=jnp.float32)
        s = jax.random.normal(k_s, (batch, dim), dtype=jnp.float32)
        for cfg in cfgs:
            out = contrastive_loss(im, s, **cfg)
            jax.block_until_ready(out)
            ref = _reference(im, s, **cfg)
            tol = 1e-2 if cfg["measure"] == "cosine" else 2e-3   # bf16 MXU path vs f32
            assert jnp.allclose(out, ref, rtol=tol, atol=tol), \
                (batch, dim, cfg, float(out), float(ref))

    print("KERNEL_OK")
</pallas_src>

<mosaic_0001>
module attributes {stable_mosaic.version = 11 : i64} {
  func.func @_stats_kernel(%arg0: i32, %arg1: memref<8x128xf32, #tpu.memory_space<vmem>>, %arg2: memref<8x128xf32, #tpu.memory_space<vmem>>, %arg3: memref<8x1xf32, #tpu.memory_space<vmem>>, %arg4: memref<8x1xf32, #tpu.memory_space<vmem>>, %arg5: memref<8x1xf32, #tpu.memory_space<vmem>>) attributes {dimension_semantics = [#tpu.dimension_semantics<parallel>], iteration_bounds = array<i64: 1>, scalar_prefetch = 0 : i64, scratch_operands = 0 : i64, tpu.core_type = #tpu.core_type<tc>, window_params = [{transform_indices = @transform_0, window_bounds = array<i64: 8, 128>}, {transform_indices = @transform_1, window_bounds = array<i64: 8, 128>}, {transform_indices = @transform_2, window_bounds = array<i64: 8, 1>}, {transform_indices = @transform_3, window_bounds = array<i64: 8, 1>}, {transform_indices = @transform_4, window_bounds = array<i64: 8, 1>}]} {
    %c0 = arith.constant 0 : index
    %c0_0 = arith.constant 0 : index
    %0 = vector.load %arg1[%c0, %c0_0] : memref<8x128xf32, #tpu.memory_space<vmem>>, vector<8x128xf32>
    %c0_1 = arith.constant 0 : index
    %c0_2 = arith.constant 0 : index
    %1 = vector.load %arg2[%c0_1, %c0_2] : memref<8x128xf32, #tpu.memory_space<vmem>>, vector<8x128xf32>
    %2 = arith.mulf %0, %0 : vector<8x128xf32>
    %cst = arith.constant dense<0.000000e+00> : vector<8xf32>
    %3 = vector.multi_reduction <add>, %2, %cst [1] : vector<8x128xf32> to vector<8xf32>
    %4 = vector.shape_cast %3 : vector<8xf32> to vector<8x1xf32>
    %cst_3 = arith.constant 1.000000e-24 : f32
    %5 = vector.broadcast %cst_3 : f32 to vector<8x1xf32>
    %6 = arith.maximumf %4, %5 : vector<8x1xf32>
    %7 = math.rsqrt %6 : vector<8x1xf32>
    %8 = arith.mulf %1, %1 : vector<8x128xf32>
    %cst_4 = arith.constant dense<0.000000e+00> : vector<8xf32>
    %9 = vector.multi_reduction <add>, %8, %cst_4 [1] : vector<8x128xf32> to vector<8xf32>
    %10 = vector.shape_cast %9 : vector<8xf32> to vector<8x1xf32>
    %cst_5 = arith.constant 1.000000e-24 : f32
    %11 = vector.broadcast %cst_5 : f32 to vector<8x1xf32>
    %12 = arith.maximumf %10, %11 : vector<8x1xf32>
    %13 = math.rsqrt %12 : vector<8x1xf32>
    %c0_6 = arith.constant 0 : index
    %c0_7 = arith.constant 0 : index
    %14 = vector.load %arg3[%c0_6, %c0_7] : memref<8x1xf32, #tpu.memory_space<vmem>>, vector<8x1xf32>
    tpu.vector_store %arg3[%c0_6, %c0_7], %7 {strides = array<i32>} : memref<8x1xf32, #tpu.memory_space<vmem>>, vector<8x1xf32>,
    %c0_8 = arith.constant 0 : index
    %c0_9 = arith.constant 0 : index
    %15 = vector.load %arg4[%c0_8, %c0_9] : memref<8x1xf32, #tpu.memory_space<vmem>>, vector<8x1xf32>
    tpu.vector_store %arg4[%c0_8, %c0_9], %13 {strides = array<i32>} : memref<8x1xf32, #tpu.memory_space<vmem>>, vector<8x1xf32>,
    %16 = arith.mulf %0, %1 : vector<8x128xf32>
    %cst_10 = arith.constant dense<0.000000e+00> : vector<8xf32>
    %17 = vector.multi_reduction <add>, %16, %cst_10 [1] : vector<8x128xf32> to vector<8xf32>
    %18 = vector.shape_cast %17 : vector<8xf32> to vector<8x1xf32>
    %19 = arith.mulf %18, %7 : vector<8x1xf32>
    %20 = arith.mulf %19, %13 : vector<8x1xf32>
    %c0_11 = arith.constant 0 : index
    %c0_12 = arith.constant 0 : index
    %21 = vector.load %arg5[%c0_11, %c0_12] : memref<8x1xf32, #tpu.memory_space<vmem>>, vector<8x1xf32>
    tpu.vector_store %arg5[%c0_11, %c0_12], %20 {strides = array<i32>} : memref<8x1xf32, #tpu.memory_space<vmem>>, vector<8x1xf32>,
    return
  }
  func.func @transform_0(%arg0: i32) -> (i32, i32) {
    %c0_i32 = arith.constant 0 : i32
    %c0_i32_0 = arith.constant 0 : i32
    return %arg0, %c0_i32 : i32, i32
  }
  func.func @transform_1(%arg0: i32) -> (i32, i32) {
    %c0_i32 = arith.constant 0 : i32
    %c0_i32_0 = arith.constant 0 : i32
    return %arg0, %c0_i32 : i32, i32
  }
  func.func @transform_2(%arg0: i32) -> (i32, i32) {
    %c0_i32 = arith.constant 0 : i32
    %c0_i32_0 = arith.constant 0 : i32
    return %arg0, %c0_i32 : i32, i32
  }
  func.func @transform_3(%arg0: i32) -> (i32, i32) {
    %c0_i32 = arith.constant 0 : i32
    %c0_i32_0 = arith.constant 0 : i32
    return %arg0, %c0_i32 : i32, i32
  }
  func.func @transform_4(%arg0: i32) -> (i32, i32) {
    %c0_i32 = arith.constant 0 : i32
    %c0_i32_0 = arith.constant 0 : i32
    return %arg0, %c0_i32 : i32, i32
  }
}

</mosaic_0001>

<llo_original>
// kernel: tpu_custom_call.1
$region0: #{tpu_custom_call.1}
  #allocation0 [shape = 'u32[]', space=smem, size = 0x4, offset = 0x4, fixed_abs, tag = 'smem constant byte address 0x4 - core index']
  #allocation1 [shape = 'u32[144,128]{1,0:T(1,128)}', space=vmem, size = 0x12000, scoped, tag = 'internal scratch']
  %s0 = inlined_call_operand.hbm [shape: f32[8,128], index: 0, kind: input, shape index: {}]
  %s1 = inlined_call_operand.hbm [shape: f32[8,128], index: 1, kind: input, shape index: {}]
  %s2 = inlined_call_operand.vmem [shape: f32[8,1], index: 2, kind: output, shape index: {0}]
  %s3 = inlined_call_operand.vmem [shape: f32[8,1], index: 3, kind: output, shape index: {1}]
  %s4 = inlined_call_operand.vmem [shape: f32[8,1], index: 4, kind: output, shape index: {2}]
  %5 = xla_tuple %s2, %s3, %s4
  %s6 = sld [smem:[#allocation0]]
  $region42: #{tpu_custom_call.1} parent=0
    _
  %s8 = ssub.s32 1, %s6
  %s9 = scalar_select 0, %s8, %s6
  $region1: #{tpu_custom_call.1} parent=0
    #allocation2 [shape = 'u8[4096]{0}', space=vmem, size = 0x1000, scoped, tag = 'input window, operand 0, single buffered']
    #allocation3 [shape = 's32[1]{0}', space=sflag, size = 0x4, scoped, tag = 'scoped memory for tpu_custom_call.1']
    #allocation4 [shape = 'u8[4096]{0}', space=vmem, size = 0x1000, scoped, tag = 'input window, operand 1, single buffered']
    #allocation5 [shape = 's32[1]{0}', space=sflag, size = 0x4, scoped, tag = 'scoped memory for tpu_custom_call.1']
    %10 = vsyncpa [#allocation3], 0
    %11 = vsyncpa [#allocation5], 0
    // Predicated region
    $region2: #{tpu_custom_call.1} parent=1 // pred_check
      _
    $region3: #{tpu_custom_call.1} parent=1 // pred_check_branch
      %13 = sbr.rel (0) target = $region5
    $region4: #{tpu_custom_call.1} parent=1 // pred_region
      %s15 = ssub.s32 128, 128
      %16 = vsyncadd [#allocation3], %s15
      %s18 = sshll.u32 [#allocation2], 4
      %s19 = int_to_ptr.vmem [resolvable:$true] %s18
      %21 = dma.hbm_to_vmem [thread:$0]  %s0, 128, %s19, [#allocation3]
    $region5: #{tpu_custom_call.1} parent=1 // pred_fallthru
      _
    // Predicated region
    $region6: #{tpu_custom_call.1} parent=1 // pred_check
      _
    $region7: #{tpu_custom_call.1} parent=1 // pred_check_branch
      %23 = sbr.rel (0) target = $region9
    $region8: #{tpu_custom_call.1} parent=1 // pred_region
      %s25 = ssub.s32 128, 128
      %26 = vsyncadd [#allocation5], %s25
      %s28 = sshll.u32 [#allocation4], 4
      %s29 = int_to_ptr.vmem [resolvable:$true] %s28
      %31 = dma.hbm_to_vmem [thread:$0]  %s1, 128, %s29, [#allocation5]
    $region9: #{tpu_custom_call.1} parent=1 // pred_fallthru
      _
    // Predicated region
    $region10: #{tpu_custom_call.1} parent=1 // pred_check
      _
    $region11: #{tpu_custom_call.1} parent=1 // pred_check_branch
      %33 = sbr.rel (0) target = $region13
    $region12: #{tpu_custom_call.1} parent=1 // pred_region
      %34 = dma.done [#allocation3], 128
    $region13: #{tpu_custom_call.1} parent=1 // pred_fallthru
      _
    // Predicated region
    $region14: #{tpu_custom_call.1} parent=1 // pred_check
      _
    $region15: #{tpu_custom_call.1} parent=1 // pred_check_branch
      %36 = sbr.rel (0) target = $region17
    $region16: #{tpu_custom_call.1} parent=1 // pred_region
      %37 = dma.done [#allocation5], 128
    $region17: #{tpu_custom_call.1} parent=1 // pred_fallthru
      _
    %v38 = vld [vmem:[#allocation2] sm:$0xff]
    %v39 = vld [vmem:[#allocation4] sm:$0xff]
    %v40 = vmul.f32 %v38, %v38
    %41 = vadd.xlane.f32.xlu0 %v40
    %v42 = vpop.xlane.xlu0 %41
    %v43 = vmax.f32 %v42, 1e-24
    %v44 = vrsqrt.pop %v43
    %v45 = vmul.f32 %v39, %v39
    %46 = vadd.xlane.f32.xlu0 %v45
    %v47 = vpop.xlane.xlu0 %46
    %v48 = vmax.f32 %v47, 1e-24
    %v49 = vrsqrt.pop %v48
    %vm50 = vcmask 7168
    %51 = vst.msk [vmem:[%s2] sm:$0xff] %vm50, %v44
    %52 = vst.msk [vmem:[%s3] sm:$0xff] %vm50, %v49
    %v53 = vmul.f32 %v38, %v39
    %54 = vadd.xlane.f32.xlu0 %v53
    %v55 = vpop.xlane.xlu0 %54
    %v56 = vmul.f32 %v55, %v44
    %v57 = vmul.f32 %v56, %v49
    %58 = vst.msk [vmem:[%s4] sm:$0xff] %vm50, %v57
    // Predicated region
    $region18: #{tpu_custom_call.1} parent=1 // pred_check
      _
    $region19: #{tpu_custom_call.1} parent=1 // pred_check_branch
      %60 = sbr.rel (0) target = $region21
    $region20: #{tpu_custom_call.1} parent=1 // pred_region
      _
    $region21: #{tpu_custom_call.1} parent=1 // pred_fallthru
      _
    // Predicated region
    $region22: #{tpu_custom_call.1} parent=1 // pred_check
      _
    $region23: #{tpu_custom_call.1} parent=1 // pred_check_branch
      %62 = sbr.rel (0) target = $region25
    $region24: #{tpu_custom_call.1} parent=1 // pred_region
      _
    $region25: #{tpu_custom_call.1} parent=1 // pred_fallthru
      _
    // Predicated region
    $region26: #{tpu_custom_call.1} parent=1 // pred_check
      _
    $region27: #{tpu_custom_call.1} parent=1 // pred_check_branch
      %64 = sbr.rel (0) target = $region29
    $region28: #{tpu_custom_call.1} parent=1 // pred_region
      _
    $region29: #{tpu_custom_call.1} parent=1 // pred_fallthru
      _
    // Predicated region
    $region30: #{tpu_custom_call.1} parent=1 // pred_check
      _
    $region31: #{tpu_custom_call.1} parent=1 // pred_check_branch
      %66 = sbr.rel (0) target = $region33
    $region32: #{tpu_custom_call.1} parent=1 // pred_region
      _
    $region33: #{tpu_custom_call.1} parent=1 // pred_fallthru
      _
    // Predicated region
    $region34: #{tpu_custom_call.1} parent=1 // pred_check
      _
    $region35: #{tpu_custom_call.1} parent=1 // pred_check_branch
      %68 = sbr.rel (0) target = $region37
    $region36: #{tpu_custom_call.1} parent=1 // pred_region
      _
    $region37: #{tpu_custom_call.1} parent=1 // pred_fallthru
      _
    // Predicated region
    $region38: #{tpu_custom_call.1} parent=1 // pred_check
      _
    $region39: #{tpu_custom_call.1} parent=1 // pred_check_branch
      %70 = sbr.rel (0) target = $region41
    $region40: #{tpu_custom_call.1} parent=1 // pred_region
      _
    $region41: #{tpu_custom_call.1} parent=1 // pred_fallthru
      _
    %71 = vsyncpa [#allocation3], 1
    %72 = vsyncpa [#allocation5], 1

</llo_original>
